<compile_context>
chip_gen: v7x
topology: tpu7x:2x2x1
jax: 0.10.0
libtpu: 0.0.40
codegen_flags: <defaults>
</compile_context>

<pallas_src>
import math

import numpy as np
import jax
import jax.numpy as jnp
from jax import lax
from jax.experimental import pallas as pl
from jax.experimental.pallas import tpu as pltpu

# ----------------------------- static sizes ---------------------------------
D_L0 = 32            # e3_d_node_l0
D_L1 = 8             # e3_d_node_l1
D_NODE_FEAT = D_L0 + 3 * D_L1        # 56
SH_DIM = 1 + 3 + 5                    # spherical harmonics up to l=2
W_NUMEL = 1664                        # tp.weight_numel (original e3nn layout)
# original flattened-weight offsets, e3nn instruction order (used by reference):
OFF_W1 = 0      # (0e x 0e -> 0e)  (32,32)
OFF_W2 = 1024   # (0e x 1o -> 1o)  (32, 8)
OFF_W3 = 1280   # (1o x 0e -> 1o)  ( 8, 8)
OFF_W4 = 1344   # (1o x 1o -> 0e)  ( 8,32)
OFF_W5 = 1600   # (1o x 2e -> 1o)  ( 8, 8)
# e3nn path-normalization coefficients (component / element):
C0 = 1.0 / math.sqrt(40.0)   # paths into 0e outputs (fan-in 32 + 8)
C1 = 0.25                    # paths into 1o outputs
INV_SQRT3 = 1.0 / math.sqrt(3.0)

# padded / permuted fc2 output layout (all block starts 128-aligned):
#   [ W1 (1024) | W2 (256) | W4 (256) | (W3|W5) copy0 | copy1 | copy2 ]
W_PAD = 1920     # 15 * 128
P_W1 = 0
P_W2 = 1024
P_W4 = 1280
P_W35 = 1536     # three 128-wide [W3|W5] copies at 1536 / 1664 / 1792

# combined per-edge "meta" half (first 128 lanes of the fused input):
MX0 = 0          # x0 lanes [0:32)
MX1 = 32         # x1 k-major lanes [32:56)
MONE = 56        # constant 1.0
MSH = 57         # sh lanes [57:66)
META_W = 128

# XV / SHM layout (width 256 each), produced by meta @ BXS:
S_Y1 = 0         # 32: C0*sh0              * x0           -> W1
S_Y2 = 32        # 32: C1/sqrt3            * x0           -> W2
S_P4 = 64        # 24: C0/sqrt3*sh1[k] x8  * x1_km        -> W4 (sum_k in expand)
S_Y3 = 88        # 24: C1/sqrt3*sh0        * x1_km        -> W3 copy k
S_T2 = 128       # 24: sh1[k] x8 (NOT part of yAB; used for the final t2*sh1 add)
S_P5 = 152       # 72: C1*s[i,k] x8        * x1_km tiled  -> W5 copy k (sum_i in expand)
SHM_W = 256

# reduce output layout:
O_OUT0 = 0       # 32: out0 (W1 + W4 contributions)
O_R35 = 32       # 24: W3+W5 contributions, k-major
O_T2 = 56        # 24: W2 contraction replicated into the 3 k slots
OUT_W = 128      # lane-dense kernel output width

TE = 256         # edge tile (reviewer: 256 on v6e/v7x, 128-256 on v5e)


def _wigner_121() -> np.ndarray:
    """Real-basis Wigner-3j tensor for 1o x 2e -> 1o (Frobenius norm 1),
    e3nn component ordering (l=1: y,z,x ; l=2: xy, yz, 3z^2-r^2, xz, x^2-y^2)."""
    E = np.zeros((5, 3, 3))
    s2, s6 = 1.0 / math.sqrt(2.0), 1.0 / math.sqrt(6.0)
    E[0, 0, 1] = E[0, 1, 0] = s2                     # xy
    E[1, 1, 2] = E[1, 2, 1] = s2                     # yz
    E[2, 0, 0] = -s6; E[2, 1, 1] = -s6; E[2, 2, 2] = 2 * s6   # 3z^2 - r^2
    E[3, 0, 2] = E[3, 2, 0] = s2                     # xz
    E[4, 0, 0] = s2; E[4, 1, 1] = -s2                # x^2 - y^2
    perm = [1, 2, 0]   # e3nn l=1 index -> cartesian (y, z, x)
    C = np.zeros((3, 5, 3))
    for i in range(3):
        for j in range(5):
            for k in range(3):
                C[i, j, k] = E[j, perm[i], perm[k]] / math.sqrt(5.0)
    return C


C121 = _wigner_121()


def _make_constants():
    """Constant matrices for the fused tensor product:
       BXS = [Bx | Bs] (128, 512): replicates x / sh into matched lane blocks.
       R   (256, 1920): 0/1 expand of yAB into the fc2-weight column layout.
       S   (1920, 128): 0/1 reduce back into [out0 | r35_km | t2 x3]."""
    Bx = np.zeros((META_W, SHM_W), np.float32)
    Bs = np.zeros((META_W, SHM_W), np.float32)
    R = np.zeros((SHM_W, W_PAD), np.float32)
    S = np.zeros((W_PAD, OUT_W), np.float32)
    sh0_row = MSH + 0
    sh1_row = lambda k: MSH + 1 + k
    sh2_row = lambda j: MSH + 4 + j

    # W1 path: y1[u] = x0[u] * C0*sh0
    for u in range(D_L0):
        Bx[MX0 + u, S_Y1 + u] = 1.0
        Bs[sh0_row, S_Y1 + u] = C0
        for w in range(D_L0):
            R[S_Y1 + u, P_W1 + u * D_L0 + w] = 1.0
            S[P_W1 + u * D_L0 + w, O_OUT0 + w] = 1.0
    # W2 path: y2[u] = x0[u] * C1/sqrt3 ; t2 replicated into 3 k slots
    for u in range(D_L0):
        Bx[MX0 + u, S_Y2 + u] = 1.0
        Bs[MONE, S_Y2 + u] = C1 * INV_SQRT3
        for w in range(D_L1):
            R[S_Y2 + u, P_W2 + u * D_L1 + w] = 1.0
            for k in range(3):
                S[P_W2 + u * D_L1 + w, O_T2 + 8 * k + w] = 1.0
    # W4 path: p4[k,u] = x1[u,k] * C0/sqrt3*sh1[k]; sum over k happens in expand
    for k in range(3):
        for u in range(D_L1):
            Bx[MX1 + 8 * k + u, S_P4 + 8 * k + u] = 1.0
            Bs[sh1_row(k), S_P4 + 8 * k + u] = C0 * INV_SQRT3
            for w in range(D_L0):
                R[S_P4 + 8 * k + u, P_W4 + u * D_L0 + w] = 1.0
    for u in range(D_L1):
        for w in range(D_L0):
            S[P_W4 + u * D_L0 + w, O_OUT0 + w] = 1.0
    # W3 path: y3[k,u] = x1[u,k] * C1/sqrt3*sh0 -> copy-k W3 half
    for k in range(3):
        for u in range(D_L1):
            Bx[MX1 + 8 * k + u, S_Y3 + 8 * k + u] = 1.0
            Bs[sh0_row, S_Y3 + 8 * k + u] = C1 * INV_SQRT3
            for w in range(D_L1):
                R[S_Y3 + 8 * k + u, P_W35 + 128 * k + u * D_L1 + w] = 1.0
                S[P_W35 + 128 * k + u * D_L1 + w, O_R35 + 8 * k + w] = 1.0
    # unscaled sh1[k] replication for the final t2*sh1 add (no Bx / R rows)
    for k in range(3):
        for u in range(D_L1):
            Bs[sh1_row(k), S_T2 + 8 * k + u] = 1.0
    # W5 path: p5[k,i,u] = x1[u,i] * C1*sum_j C121[i,j,k]*sh2[j];
    #          sum over i happens in expand; -> copy-k W5 half
    for k in range(3):
        for i in range(3):
            for u in range(D_L1):
                lane = S_P5 + 24 * k + 8 * i + u
                Bx[MX1 + 8 * i + u, lane] = 1.0
                for j in range(5):
                    c = C1 * float(C121[i, j, k])
                    if c != 0.0:
                        Bs[sh2_row(j), lane] += c
                for w in range(D_L1):
                    R[lane, P_W35 + 128 * k + 64 + u * D_L1 + w] = 1.0
    for k in range(3):
        for u in range(D_L1):
            for w in range(D_L1):
                S[P_W35 + 128 * k + 64 + u * D_L1 + w, O_R35 + 8 * k + w] = 1.0
    return np.concatenate([Bx, Bs], axis=1), R, S


BXS_NP, R_NP, S_NP = _make_constants()


# ------------------------------ Pallas kernels -------------------------------
def _edge_tp_kernel(c_ref, ln_g_ref, ln_b_ref, w1_ref, b1_ref, w2_ref, b2_ref,
                    bxs_ref, r_ref, s_ref, o_ref):
    te = c_ref.shape[0]
    meta = c_ref[:, :META_W]                       # (TE,128): [x0|x1_km|1|sh|0]
    ef = c_ref[:, META_W:]                         # (TE, d_pair)

    # ---- fc = LayerNorm -> Linear -> ReLU -> Dropout(identity) -> Linear ----
    mu = jnp.mean(ef, axis=-1, keepdims=True)
    ms = jnp.mean(ef * ef, axis=-1, keepdims=True)           # single-pass stats
    h = (ef - mu) * lax.rsqrt(ms - mu * mu + 1e-5) * ln_g_ref[...] + ln_b_ref[...]
    h = jnp.dot(h.astype(jnp.bfloat16), w1_ref[...],
                preferred_element_type=jnp.float32) + b1_ref[...]
    h = jnp.maximum(h, 0.0)
    w = jnp.dot(h.astype(jnp.bfloat16), w2_ref[...],
                preferred_element_type=jnp.float32) + b2_ref[...]     # (TE,1920)

    # ---- fused tensor product: expand -> multiply -> reduce -----------------
    # meta @ BXS -> [ XV (x replicated) | SHM (sh multipliers, scales folded) ]
    xvshm = jnp.dot(meta.astype(jnp.bfloat16), bxs_ref[...],
                    preferred_element_type=jnp.float32)               # (TE,512)
    yab = xvshm[:, :SHM_W] * xvshm[:, SHM_W:]                         # (TE,256)
    y_exp = jnp.dot(yab.astype(jnp.bfloat16), r_ref[...],
                    preferred_element_type=jnp.float32)               # (TE,1920)
    prod = (w * y_exp).astype(jnp.bfloat16)                           # f32 mul, bf16 MXU feed
    red = jnp.dot(prod, s_ref[...],
                  preferred_element_type=jnp.float32)                 # (TE,128)

    # out1_km = (W3+W5 contributions) + t2 * sh1[k]
    sh1t = xvshm[:, SHM_W + S_T2: SHM_W + S_T2 + 3 * D_L1]            # (TE,24)
    out1 = red[:, O_R35:O_R35 + 3 * D_L1] + red[:, O_T2:O_T2 + 3 * D_L1] * sh1t

    # lane-dense store: [out0 (32) | out1 k-major (24) | zero pad (72)]
    o_ref[...] = jnp.concatenate(
        [red[:, :D_L0], out1,
         jnp.zeros((te, OUT_W - D_NODE_FEAT), jnp.float32)], axis=1)


def _linear_kernel(x_ref, w_ref, b_ref, o_ref):
    o_ref[...] = (jnp.dot(x_ref[...], w_ref[...], preferred_element_type=jnp.float32)
                  + b_ref[...])


def linear_pallas(x, w, b, block_rows=256):
    n, k = x.shape
    m = w.shape[1]
    bn = block_rows if n >= block_rows else max(8, ((n + 7) // 8) * 8)
    pad = (-n) % bn
    if pad:
        x = jnp.pad(x, ((0, pad), (0, 0)))
    n_pad = x.shape[0]
    out = pl.pallas_call(
        _linear_kernel,
        out_shape=jax.ShapeDtypeStruct((n_pad, m), jnp.float32),
        grid=(n_pad // bn,),
        in_specs=[pl.BlockSpec((bn, k), lambda i: (i, 0)),
                  pl.BlockSpec((k, m), lambda i: (0, 0)),
                  pl.BlockSpec((1, m), lambda i: (0, 0))],
        out_specs=pl.BlockSpec((bn, m), lambda i: (i, 0)),
        compiler_params=pltpu.CompilerParams(dimension_semantics=("parallel",)),
    )(x, w, b.reshape(1, m))
    return out[:n]


def _pad_fc2(fc2_w, fc2_b):
    """Permute/duplicate fc2 columns to [W1 | W2 | W4 | (W3|W5) x3] (1920 wide)."""
    def reorder(m):
        w35 = jnp.concatenate([m[..., 1280:1344], m[..., 1600:1664]], axis=-1)
        return jnp.concatenate(
            [m[..., 0:1280],          # W1, W2
             m[..., 1344:1600],       # W4
             w35, w35, w35], axis=-1)
    return reorder(fc2_w), reorder(fc2_b)


def tp_conv_pallas(x_dst_km, edge_sh, edge_feats, p, te=TE):
    e = x_dst_km.shape[0]
    d_pair = edge_feats.shape[1]
    te = min(te, max(128, pl.cdiv(e, 128) * 128))   # keep >=1 tile for tiny graphs

    # host/XLA-side constant prep (would be precomputed once in production)
    fc2_w_pad, fc2_b_pad = _pad_fc2(p["fc2_w"], p["fc2_b"])
    fc1_w_bf = p["fc1_w"].astype(jnp.bfloat16)
    fc2_w_bf = fc2_w_pad.astype(jnp.bfloat16)
    bxs = jnp.asarray(BXS_NP, dtype=jnp.bfloat16)
    r_m = jnp.asarray(R_NP, dtype=jnp.bfloat16)
    s_m = jnp.asarray(S_NP, dtype=jnp.bfloat16)

    # single lane-dense edge input: [x (56) | 1 | sh (9) | 0-pad to 128 | edge_feats]
    meta = jnp.concatenate(
        [x_dst_km, jnp.ones((e, 1), jnp.float32), edge_sh,
         jnp.zeros((e, META_W - D_NODE_FEAT - 1 - SH_DIM), jnp.float32)], axis=1)
    combined = jnp.concatenate([meta, edge_feats], axis=1)           # (e, 128+d_pair)

    pad = (-e) % te
    if pad:
        combined = jnp.pad(combined, ((0, pad), (0, 0)))
    ep = combined.shape[0]

    out = pl.pallas_call(
        _edge_tp_kernel,
        out_shape=jax.ShapeDtypeStruct((ep, OUT_W), jnp.float32),
        grid=(ep // te,),
        in_specs=[
            pl.BlockSpec((te, META_W + d_pair), lambda i: (i, 0)),
            pl.BlockSpec((1, d_pair), lambda i: (0, 0)),
            pl.BlockSpec((1, d_pair), lambda i: (0, 0)),
            pl.BlockSpec((d_pair, d_pair), lambda i: (0, 0)),
            pl.BlockSpec((1, d_pair), lambda i: (0, 0)),
            pl.BlockSpec((d_pair, W_PAD), lambda i: (0, 0)),
            pl.BlockSpec((1, W_PAD), lambda i: (0, 0)),
            pl.BlockSpec((META_W, 2 * SHM_W), lambda i: (0, 0)),
            pl.BlockSpec((SHM_W, W_PAD), lambda i: (0, 0)),
            pl.BlockSpec((W_PAD, OUT_W), lambda i: (0, 0)),
        ],
        out_specs=pl.BlockSpec((te, OUT_W), lambda i: (i, 0)),
        compiler_params=pltpu.CompilerParams(
            dimension_semantics=("parallel",),
            vmem_limit_bytes=32 * 1024 * 1024),
    )(combined, p["ln_g"], p["ln_b"], fc1_w_bf, p["fc1_b"], fc2_w_bf, fc2_b_pad,
      bxs, r_m, s_m)

    # keep k-major layout; reorder back to e3nn order only after the scatter-mean
    return out[:e, :D_NODE_FEAT]


# ------------------------------ full forward ---------------------------------
def e3_gnn_forward(node, pair, l1_feats, pair_index, edge_src, edge_dst, edge_sh, p):
    B, L, d_node = node.shape
    n = B * L
    l0 = linear_pallas(node.reshape(n, d_node), p["proj_l0_w"], p["proj_l0_b"])   # (n,32)
    # l1 block reordered to k-major so per-k chunks are contiguous 8-lane slices
    l1_km = l1_feats.reshape(n, D_L1, 3).transpose(0, 2, 1).reshape(n, 3 * D_L1)
    node_graph = jnp.concatenate([l0, l1_km], axis=-1)                             # (n,56)
    b_idx, i_idx, j_idx = pair_index
    edge_feats = pair[b_idx, i_idx, j_idx]                                          # gather (glue)
    x_dst = node_graph[edge_dst]                                                    # gather (glue)
    conv_km = tp_conv_pallas(x_dst, edge_sh, edge_feats, p)                         # (E,56) k-major
    # scatter-mean over edge_src (glue)
    seg = jax.ops.segment_sum(conv_km, edge_src, num_segments=n)
    cnt = jax.ops.segment_sum(jnp.ones((conv_km.shape[0],), jnp.float32), edge_src,
                              num_segments=n)
    out = seg / jnp.maximum(cnt, 1.0)[:, None]                                      # (n,56) k-major
    l0_out = out[:, :D_L0]
    l1_new_km = out[:, D_L0:] + l1_km
    # k-major -> e3nn order, done once on n nodes (not E edges)
    l1_new = l1_new_km.reshape(n, 3, D_L1).transpose(0, 2, 1).reshape(B, L, 3 * D_L1)
    node_new = (linear_pallas(l0_out, p["proj_node_w"], p["proj_node_b"])
                .reshape(B, L, d_node) + node)
    return node_new, l1_new


# ------------------------- pure-JAX reference (check) ------------------------
def _tp_ref(x, sh, w):
    hp = lax.Precision.HIGHEST
    e = x.shape[0]
    x0 = x[:, :D_L0]
    x1 = x[:, D_L0:].reshape(e, D_L1, 3)
    sh0, sh1, sh2 = sh[:, 0], sh[:, 1:4], sh[:, 4:9]
    W1 = w[:, OFF_W1:OFF_W1 + 1024].reshape(e, 32, 32)
    W2 = w[:, OFF_W2:OFF_W2 + 256].reshape(e, 32, 8)
    W3 = w[:, OFF_W3:OFF_W3 + 64].reshape(e, 8, 8)
    W4 = w[:, OFF_W4:OFF_W4 + 256].reshape(e, 8, 32)
    W5 = w[:, OFF_W5:OFF_W5 + 64].reshape(e, 8, 8)
    out0 = C0 * (jnp.einsum("euw,eu,e->ew", W1, x0, sh0, precision=hp)
                 + INV_SQRT3 * jnp.einsum(
                     "euw,eu->ew", W4,
                     jnp.einsum("euk,ek->eu", x1, sh1, precision=hp), precision=hp))
    qv = jnp.einsum("ijk,eui,ej->euk", jnp.asarray(C121, jnp.float32), x1, sh2,
                    precision=hp)
    out1 = C1 * (INV_SQRT3 * jnp.einsum("euw,eu,ek->ewk", W2, x0, sh1, precision=hp)
                 + INV_SQRT3 * jnp.einsum("euw,euk,e->ewk", W3, x1, sh0, precision=hp)
                 + jnp.einsum("euw,euk->ewk", W5, qv, precision=hp))
    return jnp.concatenate([out0, out1.reshape(e, 3 * D_L1)], axis=-1)


def reference_forward(node, pair, l1_feats, pair_index, edge_src, edge_dst, edge_sh, p):
    hp = lax.Precision.HIGHEST
    B, L, d_node = node.shape
    n = B * L
    l0 = jnp.dot(node.reshape(n, d_node), p["proj_l0_w"], precision=hp) + p["proj_l0_b"]
    ngt = jnp.concatenate([l0, l1_feats.reshape(n, -1)], axis=-1)
    b_idx, i_idx, j_idx = pair_index
    ef = pair[b_idx, i_idx, j_idx]
    mu = ef.mean(-1, keepdims=True)
    var = ((ef - mu) ** 2).mean(-1, keepdims=True)
    h = (ef - mu) * lax.rsqrt(var + 1e-5) * p["ln_g"] + p["ln_b"]
    h = jnp.maximum(jnp.dot(h, p["fc1_w"], precision=hp) + p["fc1_b"], 0.0)
    w = jnp.dot(h, p["fc2_w"], precision=hp) + p["fc2_b"]
    conv = _tp_ref(ngt[edge_dst], edge_sh, w)
    seg = jax.ops.segment_sum(conv, edge_src, num_segments=n)
    cnt = jax.ops.segment_sum(jnp.ones((conv.shape[0],), jnp.float32), edge_src,
                              num_segments=n)
    out = (seg / jnp.maximum(cnt, 1.0)[:, None]).reshape(B, L, D_NODE_FEAT)
    l0o = out[..., :D_L0]
    l1n = out[..., D_L0:] + l1_feats
    nn_ = (jnp.dot(l0o.reshape(n, D_L0), p["proj_node_w"], precision=hp)
           + p["proj_node_b"]).reshape(B, L, d_node) + node
    return nn_, l1n


# ---------------------------------- main -------------------------------------
if __name__ == "__main__":
    B, L = 2, 8
    d_node, d_pair = 128, 128
    E = 64
    num_nodes = B * L

    key = jax.random.PRNGKey(0)
    ks = jax.random.split(key, 16)

    params = {
        "proj_l0_w": 0.05 * jax.random.normal(ks[0], (d_node, D_L0), jnp.float32),
        "proj_l0_b": 0.01 * jax.random.normal(ks[1], (1, D_L0), jnp.float32),
        "ln_g": 1.0 + 0.1 * jax.random.normal(ks[2], (1, d_pair), jnp.float32),
        "ln_b": 0.05 * jax.random.normal(ks[3], (1, d_pair), jnp.float32),
        "fc1_w": 0.05 * jax.random.normal(ks[4], (d_pair, d_pair), jnp.float32),
        "fc1_b": 0.01 * jax.random.normal(ks[5], (1, d_pair), jnp.float32),
        "fc2_w": 0.05 * jax.random.normal(ks[6], (d_pair, W_NUMEL), jnp.float32),
        "fc2_b": 0.01 * jax.random.normal(ks[7], (1, W_NUMEL), jnp.float32),
        "proj_node_w": 0.05 * jax.random.normal(ks[8], (D_L0, d_node), jnp.float32),
        "proj_node_b": 0.01 * jax.random.normal(ks[9], (1, d_node), jnp.float32),
    }

    node = jax.random.normal(ks[10], (B, L, d_node), jnp.float32)
    pair = jax.random.normal(ks[11], (B, L, L, d_pair), jnp.float32)
    l1_feats = jax.random.normal(ks[12], (B, L, 3 * D_L1), jnp.float32)
    b_idx = jax.random.randint(ks[13], (E,), 0, B)
    i_idx = jax.random.randint(ks[14], (E,), 0, L)
    j_idx = jax.random.randint(ks[15], (E,), 0, L)
    pair_index = jnp.stack([b_idx, i_idx, j_idx], axis=0)
    edge_src = b_idx * L + i_idx
    edge_dst = b_idx * L + j_idx
    edge_sh = jax.random.normal(jax.random.PRNGKey(42), (E, SH_DIM), jnp.float32)

    node_out, l1_out = e3_gnn_forward(node, pair, l1_feats, pair_index,
                                      edge_src, edge_dst, edge_sh, params)
    node_out = jax.block_until_ready(node_out)
    l1_out = jax.block_until_ready(l1_out)

    node_ref, l1_ref = reference_forward(node, pair, l1_feats, pair_index,
                                         edge_src, edge_dst, edge_sh, params)
    assert node_out.shape == (B, L, d_node) and l1_out.shape == (B, L, 3 * D_L1)
    # bf16 end-to-end MXU path (fc1/fc2 + tensor-product expand/reduce, f32 accum):
    # node residual path is essentially exact; l1 carries the full bf16 error chain.
    assert jnp.allclose(node_out, node_ref, atol=5e-3, rtol=5e-3)
    assert jnp.allclose(l1_out, l1_ref, atol=1e-2, rtol=1e-2)

    print("KERNEL_OK")
</pallas_src>

<mosaic_0001>
module attributes {stable_mosaic.version = 11 : i64} {
  func.func @_linear_kernel(%arg0: i32, %arg1: memref<16x128xf32, #tpu.memory_space<vmem>>, %arg2: memref<128x32xf32, #tpu.memory_space<vmem>>, %arg3: memref<1x32xf32, #tpu.memory_space<vmem>>, %arg4: memref<16x32xf32, #tpu.memory_space<vmem>>) attributes {dimension_semantics = [#tpu.dimension_semantics<parallel>], iteration_bounds = array<i64: 1>, scalar_prefetch = 0 : i64, scratch_operands = 0 : i64, tpu.core_type = #tpu.core_type<tc>, window_params = [{transform_indices = @transform_0, window_bounds = array<i64: 16, 128>}, {pipeline_mode = #tpu.pipeline_mode<synchronous>, transform_indices = @transform_1, window_bounds = array<i64: 128, 32>}, {pipeline_mode = #tpu.pipeline_mode<synchronous>, transform_indices = @transform_2, window_bounds = array<i64: 1, 32>}, {transform_indices = @transform_3, window_bounds = array<i64: 16, 32>}]} {
    %c0 = arith.constant 0 : index
    %c0_0 = arith.constant 0 : index
    %0 = vector.load %arg1[%c0, %c0_0] : memref<16x128xf32, #tpu.memory_space<vmem>>, vector<16x128xf32>
    %c0_1 = arith.constant 0 : index
    %c0_2 = arith.constant 0 : index
    %1 = vector.load %arg2[%c0_1, %c0_2] : memref<128x32xf32, #tpu.memory_space<vmem>>, vector<128x32xf32>
    %cst = arith.constant dense<0.000000e+00> : vector<16x32xf32>
    %2 = tpu.matmul %0, %1, %cst {dimension_numbers = #tpu.dot_dimension_numbers<[1], [0], [0], [1], [0, 0, 1, 1], [], []>} : vector<16x128xf32>, vector<128x32xf32>, vector<16x32xf32> -> vector<16x32xf32>
    %c0_3 = arith.constant 0 : index
    %c0_4 = arith.constant 0 : index
    %3 = vector.load %arg3[%c0_3, %c0_4] : memref<1x32xf32, #tpu.memory_space<vmem>>, vector<1x32xf32>
    %4 = vector.broadcast %3 : vector<1x32xf32> to vector<16x32xf32>
    %5 = arith.addf %2, %4 : vector<16x32xf32>
    %c0_5 = arith.constant 0 : index
    %c0_6 = arith.constant 0 : index
    %6 = vector.load %arg4[%c0_5, %c0_6] : memref<16x32xf32, #tpu.memory_space<vmem>>, vector<16x32xf32>
    tpu.vector_store %arg4[%c0_5, %c0_6], %5 {strides = array<i32>} : memref<16x32xf32, #tpu.memory_space<vmem>>, vector<16x32xf32>,
    return
  }
  func.func @transform_0(%arg0: i32) -> (i32, i32) {
    %c0_i32 = arith.constant 0 : i32
    %c0_i32_0 = arith.constant 0 : i32
    return %arg0, %c0_i32 : i32, i32
  }
  func.func @transform_1(%arg0: i32) -> (i32, i32) {
    %c0_i32 = arith.constant 0 : i32
    %c0_i32_0 = arith.constant 0 : i32
    %c0_i32_1 = arith.constant 0 : i32
    return %c0_i32, %c0_i32_0 : i32, i32
  }
  func.func @transform_2(%arg0: i32) -> (i32, i32) {
    %c0_i32 = arith.constant 0 : i32
    %c0_i32_0 = arith.constant 0 : i32
    %c0_i32_1 = arith.constant 0 : i32
    return %c0_i32, %c0_i32_0 : i32, i32
  }
  func.func @transform_3(%arg0: i32) -> (i32, i32) {
    %c0_i32 = arith.constant 0 : i32
    %c0_i32_0 = arith.constant 0 : i32
    return %arg0, %c0_i32 : i32, i32
  }
}

</mosaic_0001>

<llo_original>
// kernel: tpu_custom_call.1
$region0: #{tpu_custom_call.1}
  #allocation0 [shape = 'u32[]', space=smem, size = 0x4, offset = 0x4, fixed_abs, tag = 'smem constant byte address 0x4 - core index']
  #allocation1 [shape = 'u32[144,128]{1,0:T(1,128)}', space=vmem, size = 0x12000, scoped, tag = 'internal scratch']
  %s0 = inlined_call_operand.vmem [shape: f32[16,128], index: 0, kind: input, shape index: {}]
  %s1 = inlined_call_operand.vmem [shape: f32[128,32], index: 1, kind: input, shape index: {}]
  %s2 = inlined_call_operand.vmem [shape: f32[1,32], index: 2, kind: input, shape index: {}]
  %s3 = inlined_call_operand.hbm [shape: f32[16,32], index: 3, kind: output, shape index: {}]
  %s4 = sld [smem:[#allocation0]]
  $region22: #{tpu_custom_call.1} parent=0
    _
  %s6 = ssub.s32 1, %s4
  %s7 = scalar_select 0, %s6, %s4
  $region1: #{tpu_custom_call.1} parent=0
    #allocation2 [shape = 'u8[8192]{0}', space=vmem, size = 0x2000, scoped, tag = 'output window, operand 0, single buffered']
    #allocation3 [shape = 's32[1]{0}', space=sflag, size = 0x4, scoped, tag = 'scoped memory for tpu_custom_call.1']
    %8 = vsyncpa [#allocation3], 0
    // Predicated region
    $region2: #{tpu_custom_call.1} parent=1 // pred_check
      _
    $region3: #{tpu_custom_call.1} parent=1 // pred_check_branch
      %10 = sbr.rel (0) target = $region5
    $region4: #{tpu_custom_call.1} parent=1 // pred_region
      _
    $region5: #{tpu_custom_call.1} parent=1 // pred_fallthru
      _
    // Predicated region
    $region6: #{tpu_custom_call.1} parent=1 // pred_check
      _
    $region7: #{tpu_custom_call.1} parent=1 // pred_check_branch
      %12 = sbr.rel (0) target = $region9
    $region8: #{tpu_custom_call.1} parent=1 // pred_region
      _
    $region9: #{tpu_custom_call.1} parent=1 // pred_fallthru
      _
    // Predicated region
    $region10: #{tpu_custom_call.1} parent=1 // pred_check
      _
    $region11: #{tpu_custom_call.1} parent=1 // pred_check_branch
      %14 = sbr.rel (0) target = $region13
    $region12: #{tpu_custom_call.1} parent=1 // pred_region
      _
    $region13: #{tpu_custom_call.1} parent=1 // pred_fallthru
      _
    %v15 = vld [vmem:[%s0] sm:$0xff]
    %v16 = vld [vmem:[%s0 + $0x8] sm:$0xff]
    %v17 = vld [vmem:[%s1] sm:$0xff]
    %v18 = vld [vmem:[%s1 + $0x8] sm:$0xff]
    %v19 = vld [vmem:[%s1 + $0x10] sm:$0xff]
    %v20 = vld [vmem:[%s1 + $0x18] sm:$0xff]
    %v21 = vld [vmem:[%s1 + $0x20] sm:$0xff]
    %v22 = vld [vmem:[%s1 + $0x28] sm:$0xff]
    %v23 = vld [vmem:[%s1 + $0x30] sm:$0xff]
    %v24 = vld [vmem:[%s1 + $0x38] sm:$0xff]
    %v25 = vld [vmem:[%s1 + $0x40] sm:$0xff]
    %v26 = vld [vmem:[%s1 + $0x48] sm:$0xff]
    %v27 = vld [vmem:[%s1 + $0x50] sm:$0xff]
    %v28 = vld [vmem:[%s1 + $0x58] sm:$0xff]
    %v29 = vld [vmem:[%s1 + $0x60] sm:$0xff]
    %v30 = vld [vmem:[%s1 + $0x68] sm:$0xff]
    %v31 = vld [vmem:[%s1 + $0x70] sm:$0xff]
    %v32 = vld [vmem:[%s1 + $0x78] sm:$0xff]
    %v33 = vld [vmem:[%s2] sm:$0x1]
    %v35 = vlaneseq
    %v36 = vshrl.u32 %v35, 7
    %v37 = vsub.s32 0, %v36
    %v38 = vrot.slane %v33, %v37
    %40 = vmatprep.subr.mxu0 0.0
    %41 = vmatpush1.msra.mxu0 %v17
    %42 = vmatprep.subr.mxu0 0.0
    %43 = vmatpush1.msra.mxu0 %v18
    %44 = vmatprep.subr.mxu0 0.0
    %45 = vmatpush1.msra.mxu0 %v19
    %46 = vmatprep.subr.mxu0 0.0
    %47 = vmatpush1.msra.mxu0 %v20
    %48 = vmatprep.subr.mxu0 0.0
    %49 = vmatpush1.msra.mxu0 %v21
    %50 = vmatprep.subr.mxu0 0.0
    %51 = vmatpush1.msra.mxu0 %v22
    %52 = vmatprep.subr.mxu0 0.0
    %53 = vmatpush1.msra.mxu0 %v23
    %54 = vmatprep.subr.mxu0 0.0
    %55 = vmatpush1.msra.mxu0 %v24
    %56 = vmatprep.subr.mxu0 0.0
    %57 = vmatpush1.msra.mxu0 %v25
    %58 = vmatprep.subr.mxu0 0.0
    %59 = vmatpush1.msra.mxu0 %v26
    %60 = vmatprep.subr.mxu0 0.0
    %61 = vmatpush1.msra.mxu0 %v27
    %62 = vmatprep.subr.mxu0 0.0
    %63 = vmatpush1.msra.mxu0 %v28
    %64 = vmatprep.subr.mxu0 0.0
    %65 = vmatpush1.msra.mxu0 %v29
    %66 = vmatprep.subr.mxu0 0.0
    %67 = vmatpush1.msra.mxu0 %v30
    %68 = vmatprep.subr.mxu0 0.0
    %69 = vmatpush1.msra.mxu0 %v31
    %70 = vmatprep.subr.mxu0 0.0
    %71 = vmatpush1.msra.mxu0 %v32
    %72 = vmatprep.subr.mxu0 0.0
    %73 = vmatpush1.msra.mxu0 0.0
    %74 = vmatprep.subr.mxu0 0.0
    %75 = vmatpush1.msra.mxu0 0.0
    %76 = vmatprep.subr.mxu0 0.0
    %77 = vmatpush1.msra.mxu0 0.0
    %78 = vmatprep.subr.mxu0 0.0
    %79 = vmatpush1.msra.mxu0 0.0
    %80 = vmatprep.subr.mxu0 0.0
    %81 = vmatpush1.msra.mxu0 0.0
    %82 = vmatprep.subr.mxu0 0.0
    %83 = vmatpush1.msra.mxu0 0.0
    %84 = vmatprep.subr.mxu0 0.0
    %85 = vmatpush1.msra.mxu0 0.0
    %86 = vmatprep.subr.mxu0 0.0
    %87 = vmatpush1.msra.mxu0 0.0
    %88 = vmatprep.subr.mxu0 0.0
    %89 = vmatpush1.msra.mxu0 0.0
    %90 = vmatprep.subr.mxu0 0.0
    %91 = vmatpush1.msra.mxu0 0.0
    %92 = vmatprep.subr.mxu0 0.0
    %93 = vmatpush1.msra.mxu0 0.0
    %94 = vmatprep.subr.mxu0 0.0
    %95 = vmatpush1.msra.mxu0 0.0
    %96 = vmatprep.subr.mxu0 0.0
    %97 = vmatpush1.msra.mxu0 0.0
    %98 = vmatprep.subr.mxu0 0.0
    %99 = vmatpush1.msra.mxu0 0.0
    %100 = vmatprep.subr.mxu0 0.0
    %101 = vmatpush1.msra.mxu0 0.0
    %102 = vmatprep.subr.mxu0 0.0
    %103 = vmatpush1.msra.mxu0 0.0
    %104 = vmatprep.mubr.f32.mxu0 0.0
    %105 = vmatmul.mubr.f32.gmra.mrb[0].mxu0 %v15
    %v106 = vpop.f32.mrb[0].mxu0
    %v107 = vadd.f32 %v38, %v106
    %v108 = vpop.f32.mrb[0].mxu0
    %109 = vmatprep.mubr.f32.mxu0 0.0
    %110 = vmatmul.mubr.f32.gmra.mrb[0].mxu0 %v16
    %v111 = vpop.f32.mrb[0].mxu0
    %v112 = vadd.f32 %v38, %v111
    %v113 = vpop.f32.mrb[0].mxu0
    %114 = vdwg.mxu0
    %vm115 = vcmask 261120
    %116 = vst.msk [vmem:[#allocation2] sm:$0xff] %vm115, %v107
    %117 = vst.msk [vmem:[#allocation2 + $0x8] sm:$0xff] %vm115, %v112
    // Predicated region
    $region14: #{tpu_custom_call.1} parent=1 // pred_check
      _
    $region15: #{tpu_custom_call.1} parent=1 // pred_check_branch
      %119 = sbr.rel (0) target = $region17
    $region16: #{tpu_custom_call.1} parent=1 // pred_region
      %s121 = ssub.s32 256, 256
      %122 = vsyncadd [#allocation3], %s121
      %s123 = sshll.u32 [#allocation2], 4
      %s124 = int_to_ptr.vmem [resolvable:$true] %s123
      %129 = dma.vmem_to_hbm [thread:$0]  %s124, 256, %s3, [#allocation3], 128, 128, 8
    $region17: #{tpu_custom_call.1} parent=1 // pred_fallthru
      _
    // Predicated region
    $region18: #{tpu_custom_call.1} parent=1 // pred_check
      _
    $region19: #{tpu_custom_call.1} parent=1 // pred_check_branch
      %131 = sbr.rel (0) target = $region21
    $region20: #{tpu_custom_call.1} parent=1 // pred_region
      %132 = dma.done [#allocation3], 256
    $region21: #{tpu_custom_call.1} parent=1 // pred_fallthru
      _
    %133 = vsyncpa [#allocation3], 1

</llo_original>
